<compile_context>
chip_gen: v5e
topology: v5e:2x2
jax: 0.10.0
libtpu: 0.0.40
codegen_flags: <defaults>
</compile_context>

<pallas_src>
import functools

import jax
import jax.numpy as jnp
from jax import lax
from jax.experimental import pallas as pl
from jax.experimental.pallas import tpu as pltpu


def _round_up(x, m):
    return ((x + m - 1) // m) * m


# ----------------------------------------------------------------------------
# Pallas kernel: fused  (patches @ W^T + b)  ->  LayerNorm(gamma, beta)
# ----------------------------------------------------------------------------
def _patch_embed_kernel(p_ref, w_ref, b_ref, g_ref, beta_ref, o_ref):
    # p_ref:    (TM, K)  bf16  im2col patch tile         (tokens x C_in*kh*kw)
    # w_ref:    (K,  E)  bf16  flattened conv weight (transposed), VMEM-resident
    # b_ref:    (1,  E)  f32   conv bias
    # g_ref:    (1,  E)  f32   LayerNorm weight
    # beta_ref: (1,  E)  f32   LayerNorm bias
    # o_ref:    (TM, E)  f32   normalized embeddings
    y = jnp.dot(p_ref[...], w_ref[...], preferred_element_type=jnp.float32)
    y = y + b_ref[...]

    # LayerNorm statistics in f32 (two-pass: numerically safe on all gens,
    # incl. v5e which has no bf16 VPU).
    mean = jnp.mean(y, axis=-1, keepdims=True)
    centered = y - mean
    var = jnp.mean(centered * centered, axis=-1, keepdims=True)
    inv = lax.rsqrt(var + 1e-5)  # PyTorch LayerNorm default eps
    o_ref[...] = (centered * inv * g_ref[...] + beta_ref[...]).astype(o_ref.dtype)


# ----------------------------------------------------------------------------
# Glue: im2col (patch extraction) + pallas_call wrapper
# ----------------------------------------------------------------------------
def _im2col(x, kh, kw, stride, pad):
    """x: (B, C, H, W) NCHW -> (B, H_out*W_out, C*kh*kw)."""
    B, C, H, W = x.shape
    h_out = (H + 2 * pad - kh) // stride + 1
    w_out = (W + 2 * pad - kw) // stride + 1
    xp = jnp.pad(x, ((0, 0), (0, 0), (pad, pad), (pad, pad)))
    cols = []
    for i in range(kh):
        for j in range(kw):
            cols.append(
                xp[:, :, i : i + stride * h_out : stride, j : j + stride * w_out : stride]
            )  # (B, C, h_out, w_out)
    # stack -> (B, C, kh*kw, h_out, w_out); feature index = c*(kh*kw) + i*kw + j
    patches = jnp.stack(cols, axis=2).reshape(B, C * kh * kw, h_out, w_out)
    # -> (B, h_out, w_out, C*kh*kw) -> (B, h_out*w_out, C*kh*kw)
    patches = jnp.transpose(patches, (0, 2, 3, 1)).reshape(B, h_out * w_out, C * kh * kw)
    return patches, h_out, w_out


@functools.partial(jax.jit, static_argnames=("patch_size", "stride", "tile_m"))
def overlap_patch_embed(x, conv_w, conv_b, ln_w, ln_b, *, patch_size, stride,
                        tile_m=512):
    """Forward pass of OverlapPatchEmbed.

    x:       (B, C_in, H, W)          float32, NCHW
    conv_w:  (E, C_in, kh, kw)        PyTorch Conv2d weight layout
    conv_b:  (E,)
    ln_w:    (E,)
    ln_b:    (E,)
    returns: (out, H_out, W_out) with out of shape (B, H_out*W_out, E)
    """
    kh = kw = patch_size
    pad = patch_size // 2
    B, C, _, _ = x.shape
    E = conv_w.shape[0]
    K = C * kh * kw

    # TODO(synk): fuse the im2col patch extraction into the kernel (padded NHWC
    # input with memory_space=pl.ANY + manual strided make_async_copy per tile)
    # to eliminate the HBM round trip of the patch matrix entirely.
    # Casting to bf16 first at least halves that traffic and feeds the MXU at
    # its native bf16 rate.
    patches, h_out, w_out = _im2col(x.astype(jnp.bfloat16), kh, kw, stride, pad)
    M = B * h_out * w_out
    patches2d = patches.reshape(M, K)

    # Tile the token dimension; pad M up to a multiple of the tile so the grid
    # divides evenly (padded rows are sliced off after the call).
    tm = min(tile_m, _round_up(M, 8))
    m_pad = _round_up(M, tm)
    if m_pad != M:
        patches2d = jnp.pad(patches2d, ((0, m_pad - M), (0, 0)))
    n_tiles = m_pad // tm

    # (E, C, kh, kw) -> (E, K) -> (K, E); feature order matches im2col.
    w_t = conv_w.reshape(E, K).T.astype(jnp.bfloat16)
    b2 = conv_b.reshape(1, E).astype(jnp.float32)
    g2 = ln_w.reshape(1, E).astype(jnp.float32)
    beta2 = ln_b.reshape(1, E).astype(jnp.float32)

    cost = pl.CostEstimate(
        flops=2 * m_pad * K * E,
        transcendentals=m_pad,  # one rsqrt per token row
        bytes_accessed=m_pad * K * 2 + K * E * 2 + m_pad * E * 4 + 3 * E * 4,
    )

    out2d = pl.pallas_call(
        _patch_embed_kernel,
        out_shape=jax.ShapeDtypeStruct((m_pad, E), jnp.float32),
        grid_spec=pl.GridSpec(
            grid=(n_tiles,),
            in_specs=[
                pl.BlockSpec((tm, K), lambda i: (i, 0)),   # patch tile (pipelined)
                pl.BlockSpec((K, E), lambda i: (0, 0)),    # weight (resident)
                pl.BlockSpec((1, E), lambda i: (0, 0)),    # conv bias
                pl.BlockSpec((1, E), lambda i: (0, 0)),    # LN gamma
                pl.BlockSpec((1, E), lambda i: (0, 0)),    # LN beta
            ],
            out_specs=pl.BlockSpec((tm, E), lambda i: (i, 0)),  # lane-dense (full E)
        ),
        compiler_params=pltpu.CompilerParams(
            # Row tiles are independent -> megacore sharding on v7x.
            dimension_semantics=("parallel",),
            # Room for large tiles on v5e/v6e while staying under v7x's 64 MiB.
            vmem_limit_bytes=48 * 1024 * 1024,
        ),
        cost_estimate=cost,
    )(patches2d, w_t, b2, g2, beta2)

    out = out2d[:M].reshape(B, h_out * w_out, E)
    return out, h_out, w_out


# ----------------------------------------------------------------------------
# Pure-JAX reference (for a correctness check against the fused kernel)
# ----------------------------------------------------------------------------
def _reference(x, conv_w, conv_b, ln_w, ln_b, *, patch_size, stride):
    pad = patch_size // 2
    y = lax.conv_general_dilated(
        x, conv_w, window_strides=(stride, stride),
        padding=((pad, pad), (pad, pad)),
        dimension_numbers=("NCHW", "OIHW", "NCHW"),
    ) + conv_b[None, :, None, None]
    B, E, H, W = y.shape
    y = y.reshape(B, E, H * W).transpose(0, 2, 1)  # (B, N, E)
    mean = jnp.mean(y, axis=-1, keepdims=True)
    var = jnp.mean((y - mean) ** 2, axis=-1, keepdims=True)
    y = (y - mean) * lax.rsqrt(var + 1e-5) * ln_w + ln_b
    return y, H, W


if __name__ == "__main__":
    # Small, forward-consistent shapes: img 16x16, patch 7, stride 4,
    # in_chans 3, embed_dim 128 (lane-dense)  ->  H_out = W_out = 4.
    B, C_in, IMG = 2, 3, 16
    PATCH, STRIDE, EMBED = 7, 4, 128

    key = jax.random.PRNGKey(0)
    kx, kw, kb, kg, kbeta = jax.random.split(key, 5)

    x = jax.random.normal(kx, (B, C_in, IMG, IMG), dtype=jnp.float32)
    conv_w = 0.1 * jax.random.normal(kw, (EMBED, C_in, PATCH, PATCH), dtype=jnp.float32)
    conv_b = 0.1 * jax.random.normal(kb, (EMBED,), dtype=jnp.float32)
    ln_w = 1.0 + 0.05 * jax.random.normal(kg, (EMBED,), dtype=jnp.float32)
    ln_b = 0.05 * jax.random.normal(kbeta, (EMBED,), dtype=jnp.float32)

    out, H, W = overlap_patch_embed(
        x, conv_w, conv_b, ln_w, ln_b, patch_size=PATCH, stride=STRIDE
    )
    out = jax.block_until_ready(out)

    ref, Hr, Wr = _reference(
        x, conv_w, conv_b, ln_w, ln_b, patch_size=PATCH, stride=STRIDE
    )
    assert (H, W) == (Hr, Wr) == (4, 4)
    assert out.shape == (B, H * W, EMBED)
    # bf16 matmul operands vs f32 reference -> loose (but tight-for-bf16) tolerance.
    assert jnp.allclose(out, ref, atol=3e-2, rtol=3e-2), float(jnp.max(jnp.abs(out - ref)))

    print("KERNEL_OK")
</pallas_src>

<mosaic_0001>
module attributes {stable_mosaic.version = 11 : i64} {
  func.func @_patch_embed_kernel(%arg0: i32, %arg1: memref<32x147xbf16, #tpu.memory_space<vmem>>, %arg2: memref<147x128xbf16, #tpu.memory_space<vmem>>, %arg3: memref<1x128xf32, #tpu.memory_space<vmem>>, %arg4: memref<1x128xf32, #tpu.memory_space<vmem>>, %arg5: memref<1x128xf32, #tpu.memory_space<vmem>>, %arg6: memref<32x128xf32, #tpu.memory_space<vmem>>) attributes {dimension_semantics = [#tpu.dimension_semantics<parallel>], iteration_bounds = array<i64: 1>, scalar_prefetch = 0 : i64, scratch_operands = 0 : i64, tpu.core_type = #tpu.core_type<tc>, window_params = [{transform_indices = @transform_0, window_bounds = array<i64: 32, 147>}, {pipeline_mode = #tpu.pipeline_mode<synchronous>, transform_indices = @transform_1, window_bounds = array<i64: 147, 128>}, {pipeline_mode = #tpu.pipeline_mode<synchronous>, transform_indices = @transform_2, window_bounds = array<i64: 1, 128>}, {pipeline_mode = #tpu.pipeline_mode<synchronous>, transform_indices = @transform_3, window_bounds = array<i64: 1, 128>}, {pipeline_mode = #tpu.pipeline_mode<synchronous>, transform_indices = @transform_4, window_bounds = array<i64: 1, 128>}, {transform_indices = @transform_5, window_bounds = array<i64: 32, 128>}]} {
    %c0 = arith.constant 0 : index
    %c0_0 = arith.constant 0 : index
    %0 = vector.load %arg1[%c0, %c0_0] : memref<32x147xbf16, #tpu.memory_space<vmem>>, vector<32x147xbf16>
    %c0_1 = arith.constant 0 : index
    %c0_2 = arith.constant 0 : index
    %1 = vector.load %arg2[%c0_1, %c0_2] : memref<147x128xbf16, #tpu.memory_space<vmem>>, vector<147x128xbf16>
    %cst = arith.constant dense<0.000000e+00> : vector<32x128xf32>
    %2 = tpu.matmul %0, %1, %cst {dimension_numbers = #tpu.dot_dimension_numbers<[1], [0], [0], [1], [0, 0, 1, 1], [], []>} : vector<32x147xbf16>, vector<147x128xbf16>, vector<32x128xf32> -> vector<32x128xf32>
    %c0_3 = arith.constant 0 : index
    %c0_4 = arith.constant 0 : index
    %3 = vector.load %arg3[%c0_3, %c0_4] : memref<1x128xf32, #tpu.memory_space<vmem>>, vector<1x128xf32>
    %4 = vector.broadcast %3 : vector<1x128xf32> to vector<32x128xf32>
    %5 = arith.addf %2, %4 : vector<32x128xf32>
    %cst_5 = arith.constant dense<0.000000e+00> : vector<32xf32>
    %6 = vector.multi_reduction <add>, %5, %cst_5 [1] : vector<32x128xf32> to vector<32xf32>
    %7 = vector.shape_cast %6 : vector<32xf32> to vector<32x1xf32>
    %cst_6 = arith.constant 1.280000e+02 : f32
    %8 = vector.broadcast %cst_6 : f32 to vector<32x1xf32>
    %9 = arith.divf %7, %8 : vector<32x1xf32>
    %10 = vector.broadcast %9 : vector<32x1xf32> to vector<32x128xf32>
    %11 = arith.subf %5, %10 : vector<32x128xf32>
    %12 = arith.mulf %11, %11 : vector<32x128xf32>
    %cst_7 = arith.constant dense<0.000000e+00> : vector<32xf32>
    %13 = vector.multi_reduction <add>, %12, %cst_7 [1] : vector<32x128xf32> to vector<32xf32>
    %14 = vector.shape_cast %13 : vector<32xf32> to vector<32x1xf32>
    %cst_8 = arith.constant 1.280000e+02 : f32
    %15 = vector.broadcast %cst_8 : f32 to vector<32x1xf32>
    %16 = arith.divf %14, %15 : vector<32x1xf32>
    %cst_9 = arith.constant 9.99999974E-6 : f32
    %17 = vector.broadcast %cst_9 : f32 to vector<32x1xf32>
    %18 = arith.addf %16, %17 : vector<32x1xf32>
    %19 = math.rsqrt %18 : vector<32x1xf32>
    %20 = vector.broadcast %19 : vector<32x1xf32> to vector<32x128xf32>
    %21 = arith.mulf %11, %20 : vector<32x128xf32>
    %c0_10 = arith.constant 0 : index
    %c0_11 = arith.constant 0 : index
    %22 = vector.load %arg4[%c0_10, %c0_11] : memref<1x128xf32, #tpu.memory_space<vmem>>, vector<1x128xf32>
    %23 = vector.broadcast %22 : vector<1x128xf32> to vector<32x128xf32>
    %24 = arith.mulf %21, %23 : vector<32x128xf32>
    %c0_12 = arith.constant 0 : index
    %c0_13 = arith.constant 0 : index
    %25 = vector.load %arg5[%c0_12, %c0_13] : memref<1x128xf32, #tpu.memory_space<vmem>>, vector<1x128xf32>
    %26 = vector.broadcast %25 : vector<1x128xf32> to vector<32x128xf32>
    %27 = arith.addf %24, %26 : vector<32x128xf32>
    %c0_14 = arith.constant 0 : index
    %c0_15 = arith.constant 0 : index
    %28 = vector.load %arg6[%c0_14, %c0_15] : memref<32x128xf32, #tpu.memory_space<vmem>>, vector<32x128xf32>
    tpu.vector_store %arg6[%c0_14, %c0_15], %27 {strides = array<i32>} : memref<32x128xf32, #tpu.memory_space<vmem>>, vector<32x128xf32>,
    return
  }
  func.func @transform_0(%arg0: i32) -> (i32, i32) {
    %c0_i32 = arith.constant 0 : i32
    %c0_i32_0 = arith.constant 0 : i32
    return %arg0, %c0_i32 : i32, i32
  }
  func.func @transform_1(%arg0: i32) -> (i32, i32) {
    %c0_i32 = arith.constant 0 : i32
    %c0_i32_0 = arith.constant 0 : i32
    %c0_i32_1 = arith.constant 0 : i32
    return %c0_i32, %c0_i32_0 : i32, i32
  }
  func.func @transform_2(%arg0: i32) -> (i32, i32) {
    %c0_i32 = arith.constant 0 : i32
    %c0_i32_0 = arith.constant 0 : i32
    %c0_i32_1 = arith.constant 0 : i32
    return %c0_i32, %c0_i32_0 : i32, i32
  }
  func.func @transform_3(%arg0: i32) -> (i32, i32) {
    %c0_i32 = arith.constant 0 : i32
    %c0_i32_0 = arith.constant 0 : i32
    %c0_i32_1 = arith.constant 0 : i32
    return %c0_i32, %c0_i32_0 : i32, i32
  }
  func.func @transform_4(%arg0: i32) -> (i32, i32) {
    %c0_i32 = arith.constant 0 : i32
    %c0_i32_0 = arith.constant 0 : i32
    %c0_i32_1 = arith.constant 0 : i32
    return %c0_i32, %c0_i32_0 : i32, i32
  }
  func.func @transform_5(%arg0: i32) -> (i32, i32) {
    %c0_i32 = arith.constant 0 : i32
    %c0_i32_0 = arith.constant 0 : i32
    return %arg0, %c0_i32 : i32, i32
  }
}

</mosaic_0001>

<llo_original>
// kernel: overlap_patch_embed.1
$region0: #{overlap_patch_embed.1}
  #allocation0 [shape = 'u32[]', space=smem, size = 0x4, offset = 0x4, fixed_abs, tag = 'smem constant byte address 0x4 - core index']
  #allocation1 [shape = 'u32[72,128]{1,0:T(1,128)}', space=vmem, size = 0x9000, scoped, tag = 'internal scratch']
  %s0 = inlined_call_operand.vmem [shape: bf16[32,147], index: 0, kind: input, shape index: {}]
  %s1 = inlined_call_operand.vmem [shape: bf16[147,128], index: 1, kind: input, shape index: {}]
  %s2 = inlined_call_operand.vmem [shape: f32[1,128], index: 2, kind: input, shape index: {}]
  %s3 = inlined_call_operand.vmem [shape: f32[1,128], index: 3, kind: input, shape index: {}]
  %s4 = inlined_call_operand.vmem [shape: f32[1,128], index: 4, kind: input, shape index: {}]
  %s5 = inlined_call_operand.hbm [shape: f32[32,128], index: 5, kind: output, shape index: {}]
  %s6 = sld [smem:[#allocation0]]
  $region30: #{overlap_patch_embed.1} parent=0
    _
  %s8 = ssub.s32 1, %s6
  %s9 = scalar_select 0, %s8, %s6
  $region1: #{overlap_patch_embed.1} parent=0
    #allocation2 [shape = 'u8[16384]{0}', space=vmem, size = 0x4000, scoped, tag = 'output window, operand 0, single buffered']
    #allocation3 [shape = 's32[1]{0}', space=sflag, size = 0x4, scoped, tag = 'scoped memory for overlap_patch_embed.1']
    %10 = vsyncpa [#allocation3], 0
    // Predicated region
    $region2: #{overlap_patch_embed.1} parent=1 // pred_check
      _
    $region3: #{overlap_patch_embed.1} parent=1 // pred_check_branch
      %12 = sbr.rel (0) target = $region5
    $region4: #{overlap_patch_embed.1} parent=1 // pred_region
      _
    $region5: #{overlap_patch_embed.1} parent=1 // pred_fallthru
      _
    // Predicated region
    $region6: #{overlap_patch_embed.1} parent=1 // pred_check
      _
    $region7: #{overlap_patch_embed.1} parent=1 // pred_check_branch
      %14 = sbr.rel (0) target = $region9
    $region8: #{overlap_patch_embed.1} parent=1 // pred_region
      _
    $region9: #{overlap_patch_embed.1} parent=1 // pred_fallthru
      _
    // Predicated region
    $region10: #{overlap_patch_embed.1} parent=1 // pred_check
      _
    $region11: #{overlap_patch_embed.1} parent=1 // pred_check_branch
      %16 = sbr.rel (0) target = $region13
    $region12: #{overlap_patch_embed.1} parent=1 // pred_region
      _
    $region13: #{overlap_patch_embed.1} parent=1 // pred_fallthru
      _
    // Predicated region
    $region14: #{overlap_patch_embed.1} parent=1 // pred_check
      _
    $region15: #{overlap_patch_embed.1} parent=1 // pred_check_branch
      %18 = sbr.rel (0) target = $region17
    $region16: #{overlap_patch_embed.1} parent=1 // pred_region
      _
    $region17: #{overlap_patch_embed.1} parent=1 // pred_fallthru
      _
    // Predicated region
    $region18: #{overlap_patch_embed.1} parent=1 // pred_check
      _
    $region19: #{overlap_patch_embed.1} parent=1 // pred_check_branch
      %20 = sbr.rel (0) target = $region21
    $region20: #{overlap_patch_embed.1} parent=1 // pred_region
      _
    $region21: #{overlap_patch_embed.1} parent=1 // pred_fallthru
      _
    %v22 = vld [vmem:[%s0] sm:$0xff]
    %v23 = vld [vmem:[%s0 + $0x8] sm:$0xff]
    %v24 = vld [vmem:[%s0 + $0x10] sm:$0xff]
    %v25 = vld [vmem:[%s0 + $0x18] sm:$0xff]
    %v26 = vld [vmem:[%s1] sm:$0xf]
    %v27 = vld [vmem:[%s1 + $0x4] sm:$0xf]
    %v28 = vld [vmem:[%s1 + $0x8] sm:$0xf]
    %v29 = vld [vmem:[%s1 + $0xc] sm:$0xf]
    %v30 = vld [vmem:[%s1 + $0x10] sm:$0xf]
    %v31 = vld [vmem:[%s1 + $0x14] sm:$0xf]
    %v32 = vld [vmem:[%s1 + $0x18] sm:$0xf]
    %v33 = vld [vmem:[%s1 + $0x1c] sm:$0xf]
    %v34 = vld [vmem:[%s1 + $0x20] sm:$0xf]
    %v35 = vld [vmem:[%s1 + $0x24] sm:$0xf]
    %v36 = vld [vmem:[%s1 + $0x28] sm:$0xf]
    %v37 = vld [vmem:[%s1 + $0x2c] sm:$0xf]
    %v38 = vld [vmem:[%s1 + $0x30] sm:$0xf]
    %v39 = vld [vmem:[%s1 + $0x34] sm:$0xf]
    %v40 = vld [vmem:[%s1 + $0x38] sm:$0xf]
    %v41 = vld [vmem:[%s1 + $0x3c] sm:$0xf]
    %v42 = vld [vmem:[%s1 + $0x40] sm:$0xf]
    %v43 = vld [vmem:[%s1 + $0x44] sm:$0xf]
    %v44 = vld [vmem:[%s1 + $0x48] sm:$0x3]
    %v45 = vld [vmem:[%s2] sm:$0x1]
    %v47 = vperm.slane %v45, 0
    %v53 = vunpack.c.l.b16 %v22
    %v54 = vunpack.c.h.b16 %v22
    %v55 = vunpack.c.l.b16 %v23
    %v56 = vunpack.c.h.b16 %v23
    %v57 = vunpack.c.l.b16 %v24
    %v58 = vunpack.c.h.b16 %v24
    %v59 = vunpack.c.l.b16 %v25
    %v60 = vunpack.c.h.b16 %v25
    %v61 = vpack.c.b16 %v55, %v53
    %v62 = vpack.c.b16 %v56, %v54
    %v63 = vpack.c.b16 %v59, %v57
    %v64 = vpack.c.b16 %v60, %v58
    %v86 = vunpack.c.l.b16 %v26
    %v87 = vunpack.c.l.b16 %v27
    %v88 = vunpack.c.l.b16 %v28
    %v89 = vunpack.c.l.b16 %v29
    %v90 = vunpack.c.l.b16 %v30
    %v91 = vunpack.c.l.b16 %v31
    %v92 = vunpack.c.l.b16 %v32
    %v93 = vunpack.c.l.b16 %v33
    %v94 = vunpack.c.l.b16 %v34
    %v95 = vunpack.c.l.b16 %v35
    %v96 = vunpack.c.l.b16 %v36
    %v97 = vunpack.c.l.b16 %v37
    %v98 = vunpack.c.l.b16 %v38
    %v99 = vunpack.c.l.b16 %v39
    %v100 = vunpack.c.l.b16 %v40
    %v101 = vunpack.c.l.b16 %v41
    %v102 = vunpack.c.l.b16 %v42
    %v103 = vunpack.c.l.b16 %v43
    %v104 = vunpack.c.l.b16 %v44
    %v105 = vpack.c.b16 %v87, %v86
    %v106 = vpack.c.b16 %v89, %v88
    %v107 = vpack.c.b16 %v91, %v90
    %v108 = vpack.c.b16 %v93, %v92
    %v109 = vpack.c.b16 %v95, %v94
    %v110 = vpack.c.b16 %v97, %v96
    %v111 = vpack.c.b16 %v99, %v98
    %v112 = vpack.c.b16 %v101, %v100
    %v113 = vpack.c.b16 %v103, %v102
    %v114 = vpack.c.b16 %v104, %v104
    %vm124 = vcmask 154624
    %v126 = vsel %vm124, %v62, 0
    %v129 = vsel %vm124, %v64, 0
    %vm131 = vcmask 1040384
    %vm132 = vcmask 1041408
    %v133 = vsel %vm131, 4294967295, 65535
    %v134 = vsel %vm132, %v133, 0
    %v136 = vand.u32 %v114, %v134
    %138 = vmatpush.bf16.msra.mxu0 %v112
    %139 = vmatpush.bf16.msra.mxu0 %v111
    %140 = vmatpush.bf16.msra.mxu0 %v110
    %141 = vmatpush.bf16.msra.mxu0 %v109
    %142 = vmatpush.bf16.msra.mxu0 %v108
    %143 = vmatpush.bf16.msra.mxu0 %v107
    %144 = vmatpush.bf16.msra.mxu0 %v106
    %145 = vmatpush.bf16.msra.mxu0 %v105
    %146 = vmatmul.bf16.gmra.mxu0 %v61
    %v147 = vpop.f32.mrf.mxu0
    %v148 = vadd.f32 %v47, %v147
    %v149 = vpop.f32.mrf.mxu0
    %v150 = vadd.f32 %v47, %v149
    %151 = vmatmul.bf16.gmra.mxu0 %v63
    %v152 = vpop.f32.mrf.mxu0
    %v153 = vadd.f32 %v47, %v152
    %v154 = vpop.f32.mrf.mxu0
    %v155 = vadd.f32 %v47, %v154
    %156 = vdwg.mxu0
    %157 = vmatpush.bf16.msra.mxu0 0
    %158 = vmatpush.bf16.msra.mxu0 0
    %159 = vmatpush.bf16.msra.mxu0 0
    %160 = vmatpush.bf16.msra.mxu0 0
    %161 = vmatpush.bf16.msra.mxu0 0
    %162 = vmatpush.bf16.msra.mxu0 0
    %163 = vmatpush.bf16.msra.mxu0 %v136
    %164 = vmatpush.bf16.msra.mxu0 %v113
    %165 = vmatmul.bf16.gmra.mxu0 %v126
    %v166 = vpop.f32.mrf.mxu0
    %v167 = vadd.f32 %v148, %v166
    %v168 = vpop.f32.mrf.mxu0
    %v169 = vadd.f32 %v150, %v168
    %170 = vmatmul.bf16.gmra.mxu0 %v129
    %v171 = vpop.f32.mrf.mxu0
    %v172 = vadd.f32 %v153, %v171
    %v173 = vpop.f32.mrf.mxu0
    %v174 = vadd.f32 %v155, %v173
    %175 = vdwg.mxu0
    %176 = vadd.xlane.f32.xlu0 %v167
    %v177 = vpop.xlane.xlu0 %176
    %178 = vadd.xlane.f32.xlu0 %v169
    %v179 = vpop.xlane.xlu0 %178
    %180 = vadd.xlane.f32.xlu0 %v172
    %v181 = vpop.xlane.xlu0 %180
    %182 = vadd.xlane.f32.xlu0 %v174
    %v183 = vpop.xlane.xlu0 %182
    %v184 = vrcp.pop 128.0
    %v185 = vmul.f32 128.0, %v184
    %v186 = vsub.f32 1.0, %v185
    %v187 = vmul.f32 %v184, %v186
    %v188 = vadd.f32 %v184, %v187
    %vm189 = vweird.f32 %v184
    %v190 = vsel %vm189, %v184, %v188
    %v191 = vmul.f32 %v177, %v190
    %v192 = vmul.f32 %v179, %v190
    %v193 = vmul.f32 %v181, %v190
    %v194 = vmul.f32 %v183, %v190
    %v195 = vsub.f32 %v167, %v191
    %v196 = vsub.f32 %v169, %v192
    %v197 = vsub.f32 %v172, %v193
    %v198 = vsub.f32 %v174, %v194
    %v199 = vmul.f32 %v195, %v195
    %v200 = vmul.f32 %v196, %v196
    %v201 = vmul.f32 %v197, %v197
    %v202 = vmul.f32 %v198, %v198
    %203 = vadd.xlane.f32.xlu0 %v199
    %v204 = vpop.xlane.xlu0 %203
    %205 = vadd.xlane.f32.xlu0 %v200
    %v206 = vpop.xlane.xlu0 %205
    %207 = vadd.xlane.f32.xlu0 %v201
    %v208 = vpop.xlane.xlu0 %207
    %209 = vadd.xlane.f32.xlu0 %v202
    %v210 = vpop.xlane.xlu0 %209
    %v211 = vmul.f32 %v204, %v190
    %v212 = vmul.f32 %v206, %v190
    %v213 = vmul.f32 %v208, %v190
    %v214 = vmul.f32 %v210, %v190
    %v215 = vadd.f32 %v211, 1e-05
    %v216 = vadd.f32 %v212, 1e-05
    %v217 = vadd.f32 %v213, 1e-05
    %v218 = vadd.f32 %v214, 1e-05
    %v219 = vrsqrt.pop %v215
    %v220 = vmul.f32 %v219, %v215
    %v221 = vmul.f32 %v220, %v219
    %v222 = vmul.f32 0.5, %v221
    %v223 = vsub.f32 1.5, %v222
    %v224 = vmul.f32 %v219, %v223
    %vm225 = vweird.f32 %v215
    %vm226 = vweird.f32 %v219
    %vm227 = vmor %vm225, %vm226
    %v228 = vsel %vm227, %v219, %v224
    %v229 = vrsqrt.pop %v216
    %v230 = vmul.f32 %v229, %v216
    %v231 = vmul.f32 %v230, %v229
    %v232 = vmul.f32 0.5, %v231
    %v233 = vsub.f32 1.5, %v232
    %v234 = vmul.f32 %v229, %v233
    %vm235 = vweird.f32 %v216
    %vm236 = vweird.f32 %v229
    %vm237 = vmor %vm235, %vm236
    %v238 = vsel %vm237, %v229, %v234
    %v239 = vrsqrt.pop %v217
    %v240 = vmul.f32 %v239, %v217
    %v241 = vmul.f32 %v240, %v239
    %v242 = vmul.f32 0.5, %v241
    %v243 = vsub.f32 1.5, %v242
    %v244 = vmul.f32 %v239, %v243
    %vm245 = vweird.f32 %v217
    %vm246 = vweird.f32 %v239
    %vm247 = vmor %vm245, %vm246
    %v248 = vsel %vm247, %v239, %v244
    %v249 = vrsqrt.pop %v218
    %v250 = vmul.f32 %v249, %v218
    %v251 = vmul.f32 %v250, %v249
    %v252 = vmul.f32 0.5, %v251
    %v253 = vsub.f32 1.5, %v252
    %v254 = vmul.f32 %v249, %v253
    %vm255 = vweird.f32 %v218
    %vm256 = vweird.f32 %v249
    %vm257 = vmor %vm255, %vm256
    %v258 = vsel %vm257, %v249, %v254
    %v259 = vmul.f32 %v195, %v228
    %v260 = vmul.f32 %v196, %v238
    %v261 = vmul.f32 %v197, %v248
    %v262 = vmul.f32 %v198, %v258
    %v263 = vld [vmem:[%s3] sm:$0x1]
    %v265 = vperm.slane %v263, 0
    %v267 = vmul.f32 %v259, %v265
    %v268 = vmul.f32 %v260, %v265
    %v269 = vmul.f32 %v261, %v265
    %v270 = vmul.f32 %v262, %v265
    %v271 = vld [vmem:[%s4] sm:$0x1]
    %v273 = vperm.slane %v271, 0
    %v275 = vadd.f32 %v267, %v273
    %v276 = vadd.f32 %v268, %v273
    %v277 = vadd.f32 %v269, %v273
    %v278 = vadd.f32 %v270, %v273
    %279 = vst [vmem:[#allocation2] sm:$0xff] %v275
    %280 = vst [vmem:[#allocation2 + $0x8] sm:$0xff] %v276
    %281 = vst [vmem:[#allocation2 + $0x10] sm:$0xff] %v277
    %282 = vst [vmem:[#allocation2 + $0x18] sm:$0xff] %v278
    // Predicated region
    $region22: #{overlap_patch_embed.1} parent=1 // pred_check
      _
    $region23: #{overlap_patch_embed.1} parent=1 // pred_check_branch
      %284 = sbr.rel (0) target = $region25
    $region24: #{overlap_patch_embed.1} parent=1 // pred_region
      %286 = vsyncadd [#allocation3], 0
      %s287 = sshll.u32 [#allocation2], 4
      %s288 = int_to_ptr.vmem [resolvable:$true] %s287
      %s289 = sshll.u32 %s5, 4
      %s290 = int_to_ptr.hbm [resolvable:$true] %s289
      %295 = dma.vmem_to_hbm [thread:$0]  %s288, 512, %s290, [#allocation3], 128, 128, 8
    $region25: #{overlap_patch_embed.1} parent=1 // pred_fallthru
      _
    // Predicated region
    $region26: #{overlap_patch_embed.1} parent=1 // pred_check
      _
    $region27: #{overlap_patch_embed.1} parent=1 // pred_check_branch
      %297 = sbr.rel (0) target = $region29
    $region28: #{overlap_patch_embed.1} parent=1 // pred_region
      %299 = dma.done [#allocation3], 512
    $region29: #{overlap_patch_embed.1} parent=1 // pred_fallthru
      _
    %300 = vsyncpa [#allocation3], 1

</llo_original>
